<compile_context>
chip_gen: v5e
topology: v5e:2x2
jax: 0.10.0
libtpu: 0.0.40
codegen_flags: <defaults>
</compile_context>

<pallas_src>
import functools

import jax
import jax.numpy as jnp
from jax.experimental import pallas as pl
from jax.experimental.pallas import tpu as pltpu


def _round_up(x: int, k: int) -> int:
    return (x + k - 1) // k * k


def _vmem_capacity_bytes() -> int:
    try:
        return int(pltpu.get_tpu_info().vmem_capacity_bytes)
    except Exception:
        return 64 * 2**20  # conservative default (v7x has the smallest VMEM)


# --------------------------------------------------------------------------- #
# Primary path: MXU one-hot gather (small / medium N).                         #
# --------------------------------------------------------------------------- #
def _onehot_gather_kernel(ids_ref, feat_ref, out_ref):
    """out = one_hot(ids) @ feat for one (row-tile, channel-strip) block.

    ids_ref  : VMEM [TM, 1]       int32 row indices for this output tile
    feat_ref : VMEM [N_pad, TC]   resident, zero-padded feature strip
    out_ref  : VMEM [TM, TC]      output tile
    """
    n_pad = feat_ref.shape[0]
    tm = out_ref.shape[0]
    ids = ids_ref[...]                                          # (TM, 1)
    iota = jax.lax.broadcasted_iota(jnp.int32, (tm, n_pad), 1)
    # Index == N (shadow zero row), negative, or garbage tail indices match no
    # column -> exact zero output rows.  No clamp / where needed.
    one_hot = (ids == iota).astype(feat_ref.dtype)
    acc = jnp.dot(one_hot, feat_ref[...], preferred_element_type=jnp.float32)
    out_ref[...] = acc.astype(out_ref.dtype)


# --------------------------------------------------------------------------- #
# Fallback path: row-loop gather (very large N).                               #
# --------------------------------------------------------------------------- #
def _loop_gather_kernel(ids_ref, feat_ref, out_ref, *, tm, n_rows, m_rows):
    """Row-loop fallback for very large N.

    ids_ref  : SMEM [M]        scalar-prefetched row indices
                               (NOTE: SMEM pads to next_pow2(4*M) bytes, which
                               caps M for this fallback path)
    feat_ref : VMEM [N, TC]    resident feature strip
    out_ref  : VMEM [TM, TC]   output tile
    """
    ri = pl.program_id(1)
    base = ri * tm
    tc = feat_ref.shape[1]
    zero_row = jnp.zeros((1, tc), feat_ref.dtype)        # hoisted out of the loop

    def load_row(r):
        # Clamp the SMEM read (tail tiles index past M) and clamp the VMEM row
        # load on BOTH sides: VMEM refs have no runtime bounds checks.
        idx = ids_ref[jnp.minimum(base + r, m_rows - 1)]
        safe = jnp.clip(idx, 0, n_rows - 1)
        row = feat_ref[pl.ds(safe, 1), :]
        valid = jnp.logical_and(idx >= 0, idx < n_rows)  # idx == N -> zero row
        return jnp.where(valid, row, zero_row)

    n_groups = tm // 8                                   # static trip count

    def body(g, carry):
        r0 = pl.multiple_of(g * 8, 8)
        block = jnp.concatenate([load_row(r0 + k) for k in range(8)], axis=0)
        out_ref[pl.ds(r0, 8), :] = block                 # full-sublane vreg store
        return carry

    if n_groups > 0:
        jax.lax.fori_loop(0, n_groups, body, 0, unroll=True)
    for r in range(n_groups * 8, tm):                    # static tail (< 8 rows)
        out_ref[pl.ds(r, 1), :] = load_row(r)


# --------------------------------------------------------------------------- #
# Wrapper                                                                      #
# --------------------------------------------------------------------------- #
def nearest_upsample(
    features: jax.Array,
    upsamples: jax.Array,
    *,
    row_tile: int = 512,
    onehot_max_rows: int = 4096,
) -> jax.Array:
    """Pallas equivalent of NearestUpsample._closest_pool.

    features:  [N, C]
    upsamples: [M, K] integer indices; value N selects the appended zero row.
    returns:   [M, C] with out[m] = features[upsamples[m, 0]] (zeros if == N).
    """
    n, c = features.shape
    m = upsamples.shape[0]
    ids = upsamples[:, 0].astype(jnp.int32)              # only column 0 is used
    itemsize = jnp.dtype(features.dtype).itemsize

    vmem_cap = _vmem_capacity_bytes()                    # 64 MiB v7x, 128 MiB v5e/v6e
    budget = max(24 << 20, vmem_cap - (24 << 20))        # headroom for the compiler

    use_onehot = n <= onehot_max_rows
    # MXU contraction dim padded to a multiple of 128 (lane-aligned on every
    # generation, incl. v5e's 128-wide MXU). Padding rows are zeros -> inert.
    n_eff = _round_up(n, 128) if use_onehot else n

    # ---- output row tile: multiple of 8, >= 2 tiles so v7x can use both TCs ----
    if m >= 16:
        tm = min(row_tile, _round_up(pl.cdiv(m, 2), 8))
        tm = min(tm, (m // 8) * 8)
    elif m >= 8:
        tm = (m // 8) * 8
    else:
        tm = m

    def vmem_need(tm_, tc_):
        b = 2 * n_eff * tc_ * itemsize          # resident feature strip (dbl-buffered)
        b += 2 * tm_ * tc_ * itemsize           # output tiles (dbl-buffered)
        if use_onehot:
            b += tm_ * n_eff * itemsize         # one-hot operand
            b += tm_ * tc_ * 4                  # f32 accumulator
            b += 2 * tm_ * 4                    # ids tiles (dbl-buffered)
        return b

    # Shrink the row tile until at least a 128-wide channel strip fits.
    while tm > 8 and vmem_need(tm, min(c, 128)) > budget:
        tm = max(8, (tm // 2) // 8 * 8)

    # ---- channel strip: widest (full C, or a multiple of 128) within budget ----
    if c <= 128 or vmem_need(tm, c) <= budget:
        tc = c
    else:
        per_tc = 2 * n_eff * itemsize + 2 * tm * itemsize + (4 * tm if use_onehot else 0)
        fixed = (tm * n_eff * itemsize + 2 * tm * 4) if use_onehot else 0
        tc = max(128, int(max(0, budget - fixed) // per_tc) // 128 * 128)
        tc = min(tc, (c // 128) * 128)

    grid = (pl.cdiv(c, tc), pl.cdiv(m, tm))     # channel strips outer, row tiles inner
    vmem_limit = int(min(vmem_cap - (8 << 20),
                         max(32 << 20, vmem_need(tm, tc) + (2 << 20))))
    compiler_params = pltpu.CompilerParams(
        dimension_semantics=("parallel", "parallel"),  # every block is disjoint
        vmem_limit_bytes=vmem_limit,
    )
    out_shape = jax.ShapeDtypeStruct((m, c), features.dtype)

    if use_onehot:
        feat_p = features
        if n_eff != n:
            feat_p = jnp.pad(features, ((0, n_eff - n), (0, 0)))
        return pl.pallas_call(
            _onehot_gather_kernel,
            out_shape=out_shape,
            grid_spec=pltpu.PrefetchScalarGridSpec(
                num_scalar_prefetch=0,
                grid=grid,
                in_specs=[
                    # ids: lane-dense (TM, 1) VMEM block, DMA-pipelined with the output.
                    pl.BlockSpec((tm, 1), lambda cj, ri: (ri, 0)),
                    # Feature strip: full row extent with a block index that is constant
                    # along the inner row-tile axis -> DMA'd from HBM once per strip and
                    # kept resident.  (Single-buffering it would additionally halve its
                    # footprint on v7x; the 2x is already accounted for in the budget.)
                    pl.BlockSpec((n_eff, tc), lambda cj, ri: (0, cj)),
                ],
                out_specs=pl.BlockSpec((tm, tc), lambda cj, ri: (ri, cj)),
            ),
            compiler_params=compiler_params,
        )(ids.reshape(m, 1), feat_p)

    # ---- fallback for very large N: resident strip + SMEM indices ----
    kernel = functools.partial(_loop_gather_kernel, tm=tm, n_rows=n, m_rows=m)
    return pl.pallas_call(
        kernel,
        out_shape=out_shape,
        grid_spec=pltpu.PrefetchScalarGridSpec(
            num_scalar_prefetch=1,              # ids land in SMEM before the grid runs
            grid=grid,
            in_specs=[pl.BlockSpec((n, tc), lambda cj, ri, ids_ref: (0, cj))],
            out_specs=pl.BlockSpec((tm, tc), lambda cj, ri, ids_ref: (ri, cj)),
        ),
        compiler_params=compiler_params,
    )(ids, features)


if __name__ == "__main__":
    key = jax.random.PRNGKey(0)
    k_feat, k_idx = jax.random.split(key)

    # Small shapes consistent with the module: N coarse points with C channels,
    # upsampled to M fine points via an [M, K] neighbor-index table.
    N, C, M, K = 200, 128, 1200, 3
    features = jax.random.normal(k_feat, (N, C), dtype=jnp.float32)
    # Indices in [0, N]; value N must select the (virtual) zero shadow row.
    upsamples = jax.random.randint(k_idx, (M, K), 0, N + 1, dtype=jnp.int32)

    out = jax.block_until_ready(nearest_upsample(features, upsamples))

    # Pure-JAX reference with the exact PyTorch semantics.
    feat_padded = jnp.concatenate(
        [features, jnp.zeros((1, C), dtype=features.dtype)], axis=0
    )
    ref = feat_padded[upsamples[:, 0]]

    assert out.shape == (M, C)
    # The MXU one-hot gather accumulates in f32; depending on how the compiler
    # decomposes f32 operands into MXU passes the copied value can differ from
    # the source by a few ULP, so compare with a tolerance (any wrong-row
    # gather of N(0,1) features would be off by O(1)).
    assert jnp.allclose(out, ref, rtol=1e-2, atol=1e-2), "Pallas gather mismatch"
    # Shadow-row semantics (index == N) must be *exact* zeros.
    shadow = upsamples[:, 0] == N
    assert bool(jnp.all(jnp.where(shadow[:, None], out == 0.0, True)))
    print("KERNEL_OK")
</pallas_src>

<mosaic_0001>
module attributes {stable_mosaic.version = 11 : i64} {
  func.func @_onehot_gather_kernel(%arg0: i32, %arg1: i32, %arg2: memref<512x1xi32, #tpu.memory_space<vmem>>, %arg3: memref<256x128xf32, #tpu.memory_space<vmem>>, %arg4: memref<512x128xf32, #tpu.memory_space<vmem>>) attributes {dimension_semantics = [#tpu.dimension_semantics<parallel>, #tpu.dimension_semantics<parallel>], iteration_bounds = array<i64: 1, 3>, scalar_prefetch = 0 : i64, scratch_operands = 0 : i64, tpu.core_type = #tpu.core_type<tc>, window_params = [{transform_indices = @transform_0, window_bounds = array<i64: 512, 1>}, {transform_indices = @transform_1, window_bounds = array<i64: 256, 128>}, {transform_indices = @transform_2, window_bounds = array<i64: 512, 128>}]} {
    %c0 = arith.constant 0 : index
    %c0_0 = arith.constant 0 : index
    %0 = vector.load %arg2[%c0, %c0_0] : memref<512x1xi32, #tpu.memory_space<vmem>>, vector<512x1xi32>
    %1 = tpu.iota {dimensions = array<i32: 1>} : vector<512x256xi32>
    %2 = vector.broadcast %0 : vector<512x1xi32> to vector<512x256xi32>
    %3 = arith.cmpi eq, %2, %1 : vector<512x256xi32>
    %4 = arith.extui %3 : vector<512x256xi1> to vector<512x256xi32>
    %5 = arith.sitofp %4 : vector<512x256xi32> to vector<512x256xf32>
    %c0_1 = arith.constant 0 : index
    %c0_2 = arith.constant 0 : index
    %6 = vector.load %arg3[%c0_1, %c0_2] : memref<256x128xf32, #tpu.memory_space<vmem>>, vector<256x128xf32>
    %cst = arith.constant dense<0.000000e+00> : vector<512x128xf32>
    %7 = tpu.matmul %5, %6, %cst {dimension_numbers = #tpu.dot_dimension_numbers<[1], [0], [0], [1], [0, 0, 1, 1], [], []>} : vector<512x256xf32>, vector<256x128xf32>, vector<512x128xf32> -> vector<512x128xf32>
    %c0_3 = arith.constant 0 : index
    %c0_4 = arith.constant 0 : index
    %8 = vector.load %arg4[%c0_3, %c0_4] : memref<512x128xf32, #tpu.memory_space<vmem>>, vector<512x128xf32>
    tpu.vector_store %arg4[%c0_3, %c0_4], %7 {strides = array<i32>} : memref<512x128xf32, #tpu.memory_space<vmem>>, vector<512x128xf32>,
    return
  }
  func.func @transform_0(%arg0: i32, %arg1: i32) -> (i32, i32) {
    %c0_i32 = arith.constant 0 : i32
    %c0_i32_0 = arith.constant 0 : i32
    return %arg1, %c0_i32 : i32, i32
  }
  func.func @transform_1(%arg0: i32, %arg1: i32) -> (i32, i32) {
    %c0_i32 = arith.constant 0 : i32
    %c0_i32_0 = arith.constant 0 : i32
    return %c0_i32, %arg0 : i32, i32
  }
  func.func @transform_2(%arg0: i32, %arg1: i32) -> (i32, i32) {
    %c0_i32 = arith.constant 0 : i32
    return %arg1, %arg0 : i32, i32
  }
}

</mosaic_0001>

<llo_original>
// kernel: tpu_custom_call.1
$region0: #{tpu_custom_call.1}
  #allocation0 [shape = 'u32[]', space=smem, size = 0x4, offset = 0x4, fixed_abs, tag = 'smem constant byte address 0x4 - core index']
  #allocation1 [shape = 'u32[72,128]{1,0:T(1,128)}', space=vmem, size = 0x9000, scoped, tag = 'internal scratch']
  %s0 = inlined_call_operand.vmem [shape: s32[1200,1], index: 0, kind: input, shape index: {}]
  %s1 = inlined_call_operand.vmem [shape: f32[256,128], index: 1, kind: input, shape index: {}]
  %s2 = inlined_call_operand.hbm [shape: f32[1200,128], index: 2, kind: output, shape index: {}]
  %s3 = sld [smem:[#allocation0]]
  $region41: #{tpu_custom_call.1} parent=0
    _
  %s5 = ssub.s32 1, %s3
  %s6 = scalar_select 0, %s5, %s3
  $region1: #{tpu_custom_call.1} parent=0
    #allocation2 [shape = 'u8[524288]{0}', space=vmem, size = 0x80000, scoped, tag = 'output window, operand 0']
    #allocation3 [shape = 's32[2]{0}', space=sflag, size = 0x8, scoped, tag = 'scoped memory for tpu_custom_call.1']
    %7 = vsyncpa [#allocation3], 0
    %s8 = scalar_lea.sflag [#allocation3], 1
    %9 = vsyncpa %s8, 0
    loop: start=0, step=1, limit=5
    $region2: #{tpu_custom_call.1} parent=1 // loop_pre_header
      _
    $region3: #{tpu_custom_call.1} parent=1 // loop_header
      %s11 = sphi 0, %s15
      %p12 = scmp.ge.s32.totalorder %s11, 5
      %s18 = sphi 0, %s30
      %s19 = sphi 0, %s26
      %s20 = sphi 0, %s18
      %s21 = sphi 0, %s19
      %s22 = sphi 0, %s20
      %s23 = sphi 0, %s21
      %s33 = sphi 0, %s35
      %s36 = sphi 0, %s33
      %s37 = sphi 0, %s36
      %s53 = sphi 0, %s37
      %s59 = sphi 0, %s61
      %s62 = sphi 0, %s59
      %s63 = sphi 0, %s62
      %s79 = sphi 0, %s63
      %s87 = sphi 0, %s89
      %s90 = sphi 0, %s87
      %s91 = sphi 0, %s90
      %s107 = sphi 0, %s91
    $region4: #{tpu_custom_call.1} parent=1 // loop_header_branch
      %14 = sbr.rel (%p12) target = $region8
    $region5: #{tpu_custom_call.1} parent=1 // loop_body
      %s16 = ssub.s32 %s11, 1
      %s17 = ssub.s32 %s11, 2
      %s24 = sadd.s32 1, %s19
      %p25 = scmp.ge.s32.totalorder %s24, 3
      %s26 = scalar_select %p25, 0, %s24
      %s27 = sadd.s32 1, %s18
      %s28 = scalar_select %p25, %s27, %s18
      %p29 = scmp.ge.s32.totalorder %s28, 1
      %s30 = scalar_select %p29, 0, %s28
      %s31 = ssub.s32 %s19, %s26
      %p32 = scmp.eq.s32.totalorder %s31, 0
      %s34 = sadd.s32 %s33, 1
      %s35 = scalar_select %p32, %s33, %s34
      %p38 = pneg %p32
      %p39 = scmp.eq.s32.totalorder %s11, 2
      %p40 = por %p38, %p39
      %p41 = scmp.ne.s32.totalorder %s33, %s36
      %p42 = scmp.eq.s32.totalorder %s11, 0
      %p43 = por %p41, %p42
      %p44 = scmp.ne.s32.totalorder %s33, %s36
      %p45 = scmp.eq.s32.totalorder %s16, 2
      %p46 = por %p44, %p45
      %p47 = scmp.ne.s32.totalorder %s36, %s37
      %p48 = scmp.eq.s32.totalorder %s16, 0
      %p49 = por %p47, %p48
      %p50 = scmp.ne.s32.totalorder %s36, %s37
      %p51 = scmp.eq.s32.totalorder %s17, 2
      %p52 = por %p50, %p51
      %p54 = scmp.ne.s32.totalorder %s37, %s53
      %p55 = scmp.eq.s32.totalorder %s17, 0
      %p56 = por %p54, %p55
      %s57 = ssub.s32 %s18, %s30
      %p58 = scmp.eq.s32.totalorder %s57, 0
      %s60 = sadd.s32 %s59, 1
      %s61 = scalar_select %p58, %s59, %s60
      %p64 = pneg %p58
      %p65 = scmp.eq.s32.totalorder %s11, 2
      %p66 = por %p64, %p65
      %p67 = scmp.ne.s32.totalorder %s59, %s62
      %p68 = scmp.eq.s32.totalorder %s11, 0
      %p69 = por %p67, %p68
      %p70 = scmp.ne.s32.totalorder %s59, %s62
      %p71 = scmp.eq.s32.totalorder %s16, 2
      %p72 = por %p70, %p71
      %p73 = scmp.ne.s32.totalorder %s62, %s63
      %p74 = scmp.eq.s32.totalorder %s16, 0
      %p75 = por %p73, %p74
      %p76 = scmp.ne.s32.totalorder %s62, %s63
      %p77 = scmp.eq.s32.totalorder %s17, 2
      %p78 = por %p76, %p77
      %p80 = scmp.ne.s32.totalorder %s63, %s79
      %p81 = scmp.eq.s32.totalorder %s17, 0
      %p82 = por %p80, %p81
      %s83 = ssub.s32 %s19, %s26
      %s84 = ssub.s32 %s18, %s30
      %s85 = sor.u32 %s83, %s84
      %p86 = scmp.eq.s32.totalorder %s85, 0
      %s88 = sadd.s32 %s87, 1
      %s89 = scalar_select %p86, %s87, %s88
      %p92 = pneg %p86
      %p93 = scmp.eq.s32.totalorder %s11, 2
      %p94 = por %p92, %p93
      %p95 = scmp.ne.s32.totalorder %s87, %s90
      %p96 = scmp.eq.s32.totalorder %s11, 0
      %p97 = por %p95, %p96
      %p98 = scmp.ne.s32.totalorder %s87, %s90
      %p99 = scmp.eq.s32.totalorder %s16, 2
      %p100 = por %p98, %p99
      %p101 = scmp.ne.s32.totalorder %s90, %s91
      %p102 = scmp.eq.s32.totalorder %s16, 0
      %p103 = por %p101, %p102
      %p104 = scmp.ne.s32.totalorder %s90, %s91
      %p105 = scmp.eq.s32.totalorder %s17, 2
      %p106 = por %p104, %p105
      %p108 = scmp.ne.s32.totalorder %s91, %s107
      %p109 = scmp.eq.s32.totalorder %s17, 0
      %p110 = por %p108, %p109
      %p111 = scmp.le.s32.totalorder 1, %s11
      %p112 = scmp.lt.s32.totalorder %s11, 4
      %p113 = pnand %p111, %p112
      %p114 = pneg %p113
      // Predicated region
      $region9: #{tpu_custom_call.1} parent=5 // pred_check
        _
      $region10: #{tpu_custom_call.1} parent=5 // pred_check_branch
        %116 = sbr.rel (%p113) target = $region12
      $region11: #{tpu_custom_call.1} parent=5 // pred_region
        %s117 = ssub.s32 %s11, 1
        // Predicated region
        $region13: #{tpu_custom_call.1} parent=11 // pred_check
          %p118 = pneg %p75
        $region14: #{tpu_custom_call.1} parent=11 // pred_check_branch
          %120 = sbr.rel (%p118) target = $region16
        $region15: #{tpu_custom_call.1} parent=11 // pred_region
          %p121 = scmp.lt.s32.totalorder %s20, 0
          %s122 = scalar_select %p121, %s20, 0
          %s123 = smul.addr %s122, 8
          %s124 = scalar_lea.vmem %s1, %s123
        $region16: #{tpu_custom_call.1} parent=11 // pred_fallthru
          _
      $region12: #{tpu_custom_call.1} parent=5 // pred_fallthru
        _
      %p125 = scmp.lt.s32.totalorder %s11, 3
      // Predicated region
      $region17: #{tpu_custom_call.1} parent=5 // pred_check
        %p126 = pneg %p125
      $region18: #{tpu_custom_call.1} parent=5 // pred_check_branch
        %128 = sbr.rel (%p126) target = $region20
      $region19: #{tpu_custom_call.1} parent=5 // pred_region
        // Predicated region
        $region21: #{tpu_custom_call.1} parent=19 // pred_check
          %p129 = pneg %p43
        $region22: #{tpu_custom_call.1} parent=19 // pred_check_branch
          %131 = sbr.rel (%p129) target = $region24
        $region23: #{tpu_custom_call.1} parent=19 // pred_region
          %s132 = smul.u32 64, %s19
          %s133 = ssub.s32 150, %s132
          %p134 = scmp.lt.s32.totalorder %s133, 64
          %s135 = scalar_select %p134, %s133, 64
          %s136 = smul.u32 8, %s135
          %p137 = scmp.lt.s32.totalorder %s132, 149
          %s138 = scalar_select %p137, %s132, 149
          %s139 = smul.addr %s138, 8
          %s140 = scalar_lea.vmem %s0, %s139
          %s141 = smul.u32 64, %s19
          %s142 = ssub.s32 150, %s141
          %p143 = scmp.lt.s32.totalorder %s142, 64
          %s144 = scalar_select %p143, %s142, 64
          %s145 = smul.u32 8, %s144
        $region24: #{tpu_custom_call.1} parent=19 // pred_fallthru
          _
      $region20: #{tpu_custom_call.1} parent=5 // pred_fallthru
        _
      %p146 = scmp.le.s32.totalorder 1, %s11
      %p147 = scmp.lt.s32.totalorder %s11, 4
      %p148 = pnand %p146, %p147
      %p149 = pneg %p148
      // Predicated region
      $region25: #{tpu_custom_call.1} parent=5 // pred_check
        _
      $region26: #{tpu_custom_call.1} parent=5 // pred_check_branch
        %151 = sbr.rel (%p148) target = $region28
      $region27: #{tpu_custom_call.1} parent=5 // pred_region
        %s152 = ssub.s32 %s11, 1
        %s153 = smul.u32 64, %s21
        %s154 = ssub.s32 150, %s153
        %p155 = scmp.lt.s32.totalorder %s154, 64
        %s156 = scalar_select %p155, %s154, 64
        %s157 = smul.u32 8, %s156
        %p158 = scmp.lt.s32.totalorder %s153, 149
        %s159 = scalar_select %p158, %s153, 149
        %s160 = smul.addr %s159, 8
        %s161 = scalar_lea.vmem %s0, %s160
        %p162 = pneg %p49
        %p163 = pneg %p46
        %p164 = scmp.lt.s32.totalorder %s20, 0
        %s165 = scalar_select %p164, %s20, 0
        %s166 = smul.addr %s165, 8
        %s167 = scalar_lea.vmem %s1, %s166
        %p168 = pneg %p75
        %p169 = pneg %p72
        %p170 = pneg %p103
        %p171 = pneg %p100
        %s172 = sand.u32 %s90, 1
        %s173 = scalar_lea.sflag [#allocation3], %s172
        %s174 = sand.u32 %s90, 1
        %s175 = smul.addr %s174, 512
        %s176 = scalar_lea.vmem [#allocation2], %s175
        %s177 = smul.u32 64, %s21
        %s178 = ssub.s32 150, %s177
        %p179 = scmp.lt.s32.totalorder %s178, 64
        %s180 = scalar_select %p179, %s178, 64
        %s181 = smul.u32 8, %s180
        %p182 = scmp.lt.s32.totalorder %s177, 149
        %s183 = scalar_select %p182, %s177, 149
        %s184 = smul.addr %s183, 8
        %s185 = scalar_lea.vmem %s0, %s184
        %s186 = smul.u32 64, %s21
        %s187 = ssub.s32 150, %s186
        %p188 = scmp.lt.s32.totalorder %s187, 64
        %s189 = scalar_select %p188, %s187, 64
        %s190 = smul.u32 8, %s189
        %p191 = scmp.lt.s32.totalorder %s20, 0
        %s192 = scalar_select %p191, %s20, 0
        %s193 = smul.addr %s192, 8
        %s194 = scalar_lea.vmem %s1, %s193
        %s195 = smul.u32 64, %s21
        %s196 = ssub.s32 150, %s195
        %p197 = scmp.lt.s32.totalorder %s196, 64
        %s198 = scalar_select %p197, %s196, 64
        %s199 = smul.u32 8, %s198
        %v200 = vld [vmem:[%s185] sm:$0xff]
        %v201 = vld [vmem:[%s185 + $0x8] sm:$0xff]
        %v202 = vld [vmem:[%s185 + $0x10] sm:$0xff]
        %v203 = vld [vmem:[%s185 + $0x18] sm:$0xff]
        %v204 = vld [vmem:[%s185 + $0x20] sm:$0xff]
        %v205 = vld [vmem:[%s185 + $0x28] sm:$0xff]
        %v206 = vld [vmem:[%s185 + $0x30] sm:$0xff]
        %v207 = vld [vmem:[%s185 + $0x38] sm:$0xff]
        %v208 = vld [vmem:[%s185 + $0x40] sm:$0xff]
        %v209 = vld [vmem:[%s185 + $0x48] sm:$0xff]
        %v210 = vld [vmem:[%s185 + $0x50] sm:$0xff]
        %v211 = vld [vmem:[%s185 + $0x58] sm:$0xff]
        %v212 = vld [vmem:[%s185 + $0x60] sm:$0xff]
        %v213 = vld [vmem:[%s185 + $0x68] sm:$0xff]
        %v214 = vld [vmem:[%s185 + $0x70] sm:$0xff]
        %v215 = vld [vmem:[%s185 + $0x78] sm:$0xff]
        %v216 = vld [vmem:[%s185 + $0x80] sm:$0xff]
        %v217 = vld [vmem:[%s185 + $0x88] sm:$0xff]
        %v218 = vld [vmem:[%s185 + $0x90] sm:$0xff]
        %v219 = vld [vmem:[%s185 + $0x98] sm:$0xff]
        %v220 = vld [vmem:[%s185 + $0xa0] sm:$0xff]
        %v221 = vld [vmem:[%s185 + $0xa8] sm:$0xff]
        %v222 = vld [vmem:[%s185 + $0xb0] sm:$0xff]
        %v223 = vld [vmem:[%s185 + $0xb8] sm:$0xff]
        %v224 = vld [vmem:[%s185 + $0xc0] sm:$0xff]
        %v225 = vld [vmem:[%s185 + $0xc8] sm:$0xff]
        %v226 = vld [vmem:[%s185 + $0xd0] sm:$0xff]
        %v227 = vld [vmem:[%s185 + $0xd8] sm:$0xff]
        %v228 = vld [vmem:[%s185 + $0xe0] sm:$0xff]
        %v229 = vld [vmem:[%s185 + $0xe8] sm:$0xff]
        %v230 = vld [vmem:[%s185 + $0xf0] sm:$0xff]
        %v231 = vld [vmem:[%s185 + $0xf8] sm:$0xff]
        %v232 = vld [vmem:[%s185 + $0x100] sm:$0xff]
        %v233 = vld [vmem:[%s185 + $0x108] sm:$0xff]
        %v234 = vld [vmem:[%s185 + $0x110] sm:$0xff]
        %v235 = vld [vmem:[%s185 + $0x118] sm:$0xff]
        %v236 = vld [vmem:[%s185 + $0x120] sm:$0xff]
        %v237 = vld [vmem:[%s185 + $0x128] sm:$0xff]
        %v238 = vld [vmem:[%s185 + $0x130] sm:$0xff]
        %v239 = vld [vmem:[%s185 + $0x138] sm:$0xff]
        %v240 = vld [vmem:[%s185 + $0x140] sm:$0xff]
        %v241 = vld [vmem:[%s185 + $0x148] sm:$0xff]
        %v242 = vld [vmem:[%s185 + $0x150] sm:$0xff]
        %v243 = vld [vmem:[%s185 + $0x158] sm:$0xff]
        %v244 = vld [vmem:[%s185 + $0x160] sm:$0xff]
        %v245 = vld [vmem:[%s185 + $0x168] sm:$0xff]
        %v246 = vld [vmem:[%s185 + $0x170] sm:$0xff]
        %v247 = vld [vmem:[%s185 + $0x178] sm:$0xff]
        %v248 = vld [vmem:[%s185 + $0x180] sm:$0xff]
        %v249 = vld [vmem:[%s185 + $0x188] sm:$0xff]
        %v250 = vld [vmem:[%s185 + $0x190] sm:$0xff]
        %v251 = vld [vmem:[%s185 + $0x198] sm:$0xff]
        %v252 = vld [vmem:[%s185 + $0x1a0] sm:$0xff]
        %v253 = vld [vmem:[%s185 + $0x1a8] sm:$0xff]
        %v254 = vld [vmem:[%s185 + $0x1b0] sm:$0xff]
        %v255 = vld [vmem:[%s185 + $0x1b8] sm:$0xff]
        %v256 = vld [vmem:[%s185 + $0x1c0] sm:$0xff]
        %v257 = vld [vmem:[%s185 + $0x1c8] sm:$0xff]
        %v258 = vld [vmem:[%s185 + $0x1d0] sm:$0xff]
        %v259 = vld [vmem:[%s185 + $0x1d8] sm:$0xff]
        %v260 = vld [vmem:[%s185 + $0x1e0] sm:$0xff]
        %v261 = vld [vmem:[%s185 + $0x1e8] sm:$0xff]
        %v262 = vld [vmem:[%s185 + $0x1f0] sm:$0xff]
        %v263 = vld [vmem:[%s185 + $0x1f8] sm:$0xff]
        %v264 = vlaneseq
        %v265 = vand.u32 %v264, 127
        %v266 = vadd.s32 %v265, 128
        %267 = vset.pattern.permute.xlu0 0
        %268 = vperm.xlu0 %267, %v200
        %v269 = vpop.permute.xlu0 %268
        %270 = vset.pattern.permute.xlu0 0
        %271 = vperm.xlu0 %270, %v201
        %v272 = vpop.permute.xlu0 %271
        %273 = vset.pattern.permute.xlu0 0
        %274 = vperm.xlu0 %273, %v202
        %v275 = vpop.permute.xlu0 %274
        %276 = vset.pattern.permute.xlu0 0
        %277 = vperm.xlu0 %276, %v203
        %v278 = vpop.permute.xlu0 %277
        %279 = vset.pattern.permute.xlu0 0
        %280 = vperm.xlu0 %279, %v204
        %v281 = vpop.permute.xlu0 %280
        %282 = vset.pattern.permute.xlu0 0
        %283 = vperm.xlu0 %282, %v205
        %v284 = vpop.permute.xlu0 %283
        %285 = vset.pattern.permute.xlu0 0
        %286 = vperm.xlu0 %285, %v206
        %v287 = vpop.permute.xlu0 %286
        %288 = vset.pattern.permute.xlu0 0
        %289 = vperm.xlu0 %288, %v207
        %v290 = vpop.permute.xlu0 %289
        %291 = vset.pattern.permute.xlu0 0
        %292 = vperm.xlu0 %291, %v208
        %v293 = vpop.permute.xlu0 %292
        %294 = vset.pattern.permute.xlu0 0
        %295 = vperm.xlu0 %294, %v209
        %v296 = vpop.permute.xlu0 %295
        %297 = vset.pattern.permute.xlu0 0
        %298 = vperm.xlu0 %297, %v210
        %v299 = vpop.permute.xlu0 %298
        %300 = vset.pattern.permute.xlu0 0
        %301 = vperm.xlu0 %300, %v211
        %v302 = vpop.permute.xlu0 %301
        %303 = vset.pattern.permute.xlu0 0
        %304 = vperm.xlu0 %303, %v212
        %v305 = vpop.permute.xlu0 %304
        %306 = vset.pattern.permute.xlu0 0
        %307 = vperm.xlu0 %306, %v213
        %v308 = vpop.permute.xlu0 %307
        %309 = vset.pattern.permute.xlu0 0
        %310 = vperm.xlu0 %309, %v214
        %v311 = vpop.permute.xlu0 %310
        %312 = vset.pattern.permute.xlu0 0
        %313 = vperm.xlu0 %312, %v215
        %v314 = vpop.permute.xlu0 %313
        %315 = vset.pattern.permute.xlu0 0
        %316 = vperm.xlu0 %315, %v216
        %v317 = vpop.permute.xlu0 %316
        %318 = vset.pattern.permute.xlu0 0
        %319 = vperm.xlu0 %318, %v217
        %v320 = vpop.permute.xlu0 %319
        %321 = vset.pattern.permute.xlu0 0
        %322 = vperm.xlu0 %321, %v218
        %v323 = vpop.permute.xlu0 %322
        %324 = vset.pattern.permute.xlu0 0
        %325 = vperm.xlu0 %324, %v219
        %v326 = vpop.permute.xlu0 %325
        %327 = vset.pattern.permute.xlu0 0
        %328 = vperm.xlu0 %327, %v220
        %v329 = vpop.permute.xlu0 %328
        %330 = vset.pattern.permute.xlu0 0
        %331 = vperm.xlu0 %330, %v221
        %v332 = vpop.permute.xlu0 %331
        %333 = vset.pattern.permute.xlu0 0
        %334 = vperm.xlu0 %333, %v222
        %v335 = vpop.permute.xlu0 %334
        %336 = vset.pattern.permute.xlu0 0
        %337 = vperm.xlu0 %336, %v223
        %v338 = vpop.permute.xlu0 %337
        %339 = vset.pattern.permute.xlu0 0
        %340 = vperm.xlu0 %339, %v224
        %v341 = vpop.permute.xlu0 %340
        %342 = vset.pattern.permute.xlu0 0
        %343 = vperm.xlu0 %342, %v225
        %v344 = vpop.permute.xlu0 %343
        %345 = vset.pattern.permute.xlu0 0
        %346 = vperm.xlu0 %345, %v226
        %v347 = vpop.permute.xlu0 %346
        %348 = vset.pattern.permute.xlu0 0
        %349 = vperm.xlu0 %348, %v227
        %v350 = vpop.permute.xlu0 %349
        %351 = vset.pattern.permute.xlu0 0
        %352 = vperm.xlu0 %351, %v228
        %v353 = vpop.permute.xlu0 %352
        %354 = vset.pattern.permute.xlu0 0
        %355 = vperm.xlu0 %354, %v229
        %v356 = vpop.permute.xlu0 %355
        %357 = vset.pattern.permute.xlu0 0
        %358 = vperm.xlu0 %357, %v230
        %v359 = vpop.permute.xlu0 %358
        %360 = vset.pattern.permute.xlu0 0
        %361 = vperm.xlu0 %360, %v231
        %v362 = vpop.permute.xlu0 %361
        %363 = vset.pattern.permute.xlu0 0
        %364 = vperm.xlu0 %363, %v232
        %v365 = vpop.permute.xlu0 %364
        %366 = vset.pattern.permute.xlu0 0
        %367 = vperm.xlu0 %366, %v233
        %v368 = vpop.permute.xlu0 %367
        %369 = vset.pattern.permute.xlu0 0
        %370 = vperm.xlu0 %369, %v234
        %v371 = vpop.permute.xlu0 %370
        %372 = vset.pattern.permute.xlu0 0
        %373 = vperm.xlu0 %372, %v235
        %v374 = vpop.permute.xlu0 %373
        %375 = vset.pattern.permute.xlu0 0
        %376 = vperm.xlu0 %375, %v236
        %v377 = vpop.permute.xlu0 %376
        %378 = vset.pattern.permute.xlu0 0
        %379 = vperm.xlu0 %378, %v237
        %v380 = vpop.permute.xlu0 %379
        %381 = vset.pattern.permute.xlu0 0
        %382 = vperm.xlu0 %381, %v238
        %v383 = vpop.permute.xlu0 %382
        %384 = vset.pattern.permute.xlu0 0
        %385 = vperm.xlu0 %384, %v239
        %v386 = vpop.permute.xlu0 %385
        %387 = vset.pattern.permute.xlu0 0
        %388 = vperm.xlu0 %387, %v240
        %v389 = vpop.permute.xlu0 %388
        %390 = vset.pattern.permute.xlu0 0
        %391 = vperm.xlu0 %390, %v241
        %v392 = vpop.permute.xlu0 %391
        %393 = vset.pattern.permute.xlu0 0
        %394 = vperm.xlu0 %393, %v242
        %v395 = vpop.permute.xlu0 %394
        %396 = vset.pattern.permute.xlu0 0
        %397 = vperm.xlu0 %396, %v243
        %v398 = vpop.permute.xlu0 %397
        %399 = vset.pattern.permute.xlu0 0
        %400 = vperm.xlu0 %399, %v244
        %v401 = vpop.permute.xlu0 %400
        %402 = vset.pattern.permute.xlu0 0
        %403 = vperm.xlu0 %402, %v245
        %v404 = vpop.permute.xlu0 %403
        %405 = vset.pattern.permute.xlu0 0
        %406 = vperm.xlu0 %405, %v246
        %v407 = vpop.permute.xlu0 %406
        %408 = vset.pattern.permute.xlu0 0
        %409 = vperm.xlu0 %408, %v247
        %v410 = vpop.permute.xlu0 %409
        %411 = vset.pattern.permute.xlu0 0
        %412 = vperm.xlu0 %411, %v248
        %v413 = vpop.permute.xlu0 %412
        %414 = vset.pattern.permute.xlu0 0
        %415 = vperm.xlu0 %414, %v249
        %v416 = vpop.permute.xlu0 %415
        %417 = vset.pattern.permute.xlu0 0
        %418 = vperm.xlu0 %417, %v250
        %v419 = vpop.permute.xlu0 %418
        %420 = vset.pattern.permute.xlu0 0
        %421 = vperm.xlu0 %420, %v251
        %v422 = vpop.permute.xlu0 %421
        %423 = vset.pattern.permute.xlu0 0
        %424 = vperm.xlu0 %423, %v252
        %v425 = vpop.permute.xlu0 %424
        %426 = vset.pattern.permute.xlu0 0
        %427 = vperm.xlu0 %426, %v253
        %v428 = vpop.permute.xlu0 %427
        %429 = vset.pattern.permute.xlu0 0
        %430 = vperm.xlu0 %429, %v254
        %v431 = vpop.permute.xlu0 %430
        %432 = vset.pattern.permute.xlu0 0
        %433 = vperm.xlu0 %432, %v255
        %v434 = vpop.permute.xlu0 %433
        %435 = vset.pattern.permute.xlu0 0
        %436 = vperm.xlu0 %435, %v256
        %v437 = vpop.permute.xlu0 %436
        %438 = vset.pattern.permute.xlu0 0
        %439 = vperm.xlu0 %438, %v257
        %v440 = vpop.permute.xlu0 %439
        %441 = vset.pattern.permute.xlu0 0
        %442 = vperm.xlu0 %441, %v258
        %v443 = vpop.permute.xlu0 %442
        %444 = vset.pattern.permute.xlu0 0
        %445 = vperm.xlu0 %444, %v259
        %v446 = vpop.permute.xlu0 %445
        %447 = vset.pattern.permute.xlu0 0
        %448 = vperm.xlu0 %447, %v260
        %v449 = vpop.permute.xlu0 %448
        %450 = vset.pattern.permute.xlu0 0
        %451 = vperm.xlu0 %450, %v261
        %v452 = vpop.permute.xlu0 %451
        %453 = vset.pattern.permute.xlu0 0
        %454 = vperm.xlu0 %453, %v262
        %v455 = vpop.permute.xlu0 %454
        %456 = vset.pattern.permute.xlu0 0
        %457 = vperm.xlu0 %456, %v263
        %v458 = vpop.permute.xlu0 %457
        %vm459 = vcmp.eq.s32.totalorder %v269, %v265
        %vm460 = vcmp.eq.s32.totalorder %v269, %v266
        %vm461 = vcmp.eq.s32.totalorder %v272, %v265
        %vm462 = vcmp.eq.s32.totalorder %v272, %v266
        %vm463 = vcmp.eq.s32.totalorder %v275, %v265
        %vm464 = vcmp.eq.s32.totalorder %v275, %v266
        %vm465 = vcmp.eq.s32.totalorder %v278, %v265
        %vm466 = vcmp.eq.s32.totalorder %v278, %v266
        %vm467 = vcmp.eq.s32.totalorder %v281, %v265
        %vm468 = vcmp.eq.s32.totalorder %v281, %v266
        %vm469 = vcmp.eq.s32.totalorder %v284, %v265
        %vm470 = vcmp.eq.s32.totalorder %v284, %v266
        %vm471 = vcmp.eq.s32.totalorder %v287, %v265
        %vm472 = vcmp.eq.s32.totalorder %v287, %v266
        %vm473 = vcmp.eq.s32.totalorder %v290, %v265
        %vm474 = vcmp.eq.s32.totalorder %v290, %v266
        %vm475 = vcmp.eq.s32.totalorder %v293, %v265
        %vm476 = vcmp.eq.s32.totalorder %v293, %v266
        %vm477 = vcmp.eq.s32.totalorder %v296, %v265
        %vm478 = vcmp.eq.s32.totalorder %v296, %v266
        %vm479 = vcmp.eq.s32.totalorder %v299, %v265
        %vm480 = vcmp.eq.s32.totalorder %v299, %v266
        %vm481 = vcmp.eq.s32.totalorder %v302, %v265
        %vm482 = vcmp.eq.s32.totalorder %v302, %v266
        %vm483 = vcmp.eq.s32.totalorder %v305, %v265
        %vm484 = vcmp.eq.s32.totalorder %v305, %v266
        %vm485 = vcmp.eq.s32.totalorder %v308, %v265
        %vm486 = vcmp.eq.s32.totalorder %v308, %v266
        %vm487 = vcmp.eq.s32.totalorder %v311, %v265
        %vm488 = vcmp.eq.s32.totalorder %v311, %v266
        %vm489 = vcmp.eq.s32.totalorder %v314, %v265
        %vm490 = vcmp.eq.s32.totalorder %v314, %v266
        %vm491 = vcmp.eq.s32.totalorder %v317, %v265
        %vm492 = vcmp.eq.s32.totalorder %v317, %v266
        %vm493 = vcmp.eq.s32.totalorder %v320, %v265
        %vm494 = vcmp.eq.s32.totalorder %v320, %v266
        %vm495 = vcmp.eq.s32.totalorder %v323, %v265
        %vm496 = vcmp.eq.s32.totalorder %v323, %v266
        %vm497 = vcmp.eq.s32.totalorder %v326, %v265
        %vm498 = vcmp.eq.s32.totalorder %v326, %v266
        %vm499 = vcmp.eq.s32.totalorder %v329, %v265
        %vm500 = vcmp.eq.s32.totalorder %v329, %v266
        %vm501 = vcmp.eq.s32.totalorder %v332, %v265
        %vm502 = vcmp.eq.s32.totalorder %v332, %v266
        %vm503 = vcmp.eq.s32.totalorder %v335, %v265
        %vm504 = vcmp.eq.s32.totalorder %v335, %v266
        %vm505 = vcmp.eq.s32.totalorder %v338, %v265
        %vm506 = vcmp.eq.s32.totalorder %v338, %v266
        %vm507 = vcmp.eq.s32.totalorder %v341, %v265
        %vm508 = vcmp.eq.s32.totalorder %v341, %v266
        %vm509 = vcmp.eq.s32.totalorder %v344, %v265
        %vm510 = vcmp.eq.s32.totalorder %v344, %v266
        %vm511 = vcmp.eq.s32.totalorder %v347, %v265
        %vm512 = vcmp.eq.s32.totalorder %v347, %v266
        %vm513 = vcmp.eq.s32.totalorder %v350, %v265
        %vm514 = vcmp.eq.s32.totalorder %v350, %v266
        %vm515 = vcmp.eq.s32.totalorder %v353, %v265
        %vm516 = vcmp.eq.s32.totalorder %v353, %v266
        %vm517 = vcmp.eq.s32.totalorder %v356, %v265
        %vm518 = vcmp.eq.s32.totalorder %v356, %v266
        %vm519 = vcmp.eq.s32.totalorder %v359, %v265
        %vm520 = vcmp.eq.s32.totalorder %v359, %v266
        %vm521 = vcmp.eq.s32.totalorder %v362, %v265
        %vm522 = vcmp.eq.s32.totalorder %v362, %v266
        %vm523 = vcmp.eq.s32.totalorder %v365, %v265
        %vm524 = vcmp.eq.s32.totalorder %v365, %v266
        %vm525 = vcmp.eq.s32.totalorder %v368, %v265
        %vm526 = vcmp.eq.s32.totalorder %v368, %v266
        %vm527 = vcmp.eq.s32.totalorder %v371, %v265
        %vm528 = vcmp.eq.s32.totalorder %v371, %v266
        %vm529 = vcmp.eq.s32.totalorder %v374, %v265
        %vm530 = vcmp.eq.s32.totalorder %v374, %v266
        %vm531 = vcmp.eq.s32.totalorder %v377, %v265
        %vm532 = vcmp.eq.s32.totalorder %v377, %v266
        %vm533 = vcmp.eq.s32.totalorder %v380, %v265
        %vm534 = vcmp.eq.s32.totalorder %v380, %v266
        %vm535 = vcmp.eq.s32.totalorder %v383, %v265
        %vm536 = vcmp.eq.s32.totalorder %v383, %v266
        %vm537 = vcmp.eq.s32.totalorder %v386, %v265
        %vm538 = vcmp.eq.s32.totalorder %v386, %v266
        %vm539 = vcmp.eq.s32.totalorder %v389, %v265
        %vm540 = vcmp.eq.s32.totalorder %v389, %v266
        %vm541 = vcmp.eq.s32.totalorder %v392, %v265
        %vm542 = vcmp.eq.s32.totalorder %v392, %v266
        %vm543 = vcmp.eq.s32.totalorder %v395, %v265
        %vm544 = vcmp.eq.s32.totalorder %v395, %v266
        %vm545 = vcmp.eq.s32.totalorder %v398, %v265
        %vm546 = vcmp.eq.s32.totalorder %v398, %v266
        %vm547 = vcmp.eq.s32.totalorder %v401, %v265
        %vm548 = vcmp.eq.s32.totalorder %v401, %v266
        %vm549 = vcmp.eq.s32.totalorder %v404, %v265
        %vm550 = vcmp.eq.s32.totalorder %v404, %v266
        %vm551 = vcmp.eq.s32.totalorder %v407, %v265
        %vm552 = vcmp.eq.s32.totalorder %v407, %v266
        %vm553 = vcmp.eq.s32.totalorder %v410, %v265
        %vm554 = vcmp.eq.s32.totalorder %v410, %v266
        %vm555 = vcmp.eq.s32.totalorder %v413, %v265
        %vm556 = vcmp.eq.s32.totalorder %v413, %v266
        %vm557 = vcmp.eq.s32.totalorder %v416, %v265
        %vm558 = vcmp.eq.s32.totalorder %v416, %v266
        %vm559 = vcmp.eq.s32.totalorder %v419, %v265
        %vm560 = vcmp.eq.s32.totalorder %v419, %v266
        %vm561 = vcmp.eq.s32.totalorder %v422, %v265
        %vm562 = vcmp.eq.s32.totalorder %v422, %v266
        %vm563 = vcmp.eq.s32.totalorder %v425, %v265
        %vm564 = vcmp.eq.s32.totalorder %v425, %v266
        %vm565 = vcmp.eq.s32.totalorder %v428, %v265
        %vm566 = vcmp.eq.s32.totalorder %v428, %v266
        %vm567 = vcmp.eq.s32.totalorder %v431, %v265
        %vm568 = vcmp.eq.s32.totalorder %v431, %v266
        %vm569 = vcmp.eq.s32.totalorder %v434, %v265
        %vm570 = vcmp.eq.s32.totalorder %v434, %v266
        %vm571 = vcmp.eq.s32.totalorder %v437, %v265
        %vm572 = vcmp.eq.s32.totalorder %v437, %v266
        %vm573 = vcmp.eq.s32.totalorder %v440, %v265
        %vm574 = vcmp.eq.s32.totalorder %v440, %v266
        %vm575 = vcmp.eq.s32.totalorder %v443, %v265
        %vm576 = vcmp.eq.s32.totalorder %v443, %v266
        %vm577 = vcmp.eq.s32.totalorder %v446, %v265
        %vm578 = vcmp.eq.s32.totalorder %v446, %v266
        %vm579 = vcmp.eq.s32.totalorder %v449, %v265
        %vm580 = vcmp.eq.s32.totalorder %v449, %v266
        %vm581 = vcmp.eq.s32.totalorder %v452, %v265
        %vm582 = vcmp.eq.s32.totalorder %v452, %v266
        %vm583 = vcmp.eq.s32.totalorder %v455, %v265
        %vm584 = vcmp.eq.s32.totalorder %v455, %v266
        %vm585 = vcmp.eq.s32.totalorder %v458, %v265
        %vm586 = vcmp.eq.s32.totalorder %v458, %v266
        %v587 = vsel %vm459, 1, 0
        %v588 = vsel %vm460, 1, 0
        %v589 = vsel %vm461, 1, 0
        %v590 = vsel %vm462, 1, 0
        %v591 = vsel %vm463, 1, 0
        %v592 = vsel %vm464, 1, 0
        %v593 = vsel %vm465, 1, 0
        %v594 = vsel %vm466, 1, 0
        %v595 = vsel %vm467, 1, 0
        %v596 = vsel %vm468, 1, 0
        %v597 = vsel %vm469, 1, 0
        %v598 = vsel %vm470, 1, 0
        %v599 = vsel %vm471, 1, 0
        %v600 = vsel %vm472, 1, 0
        %v601 = vsel %vm473, 1, 0
        %v602 = vsel %vm474, 1, 0
        %v603 = vsel %vm475, 1, 0
        %v604 = vsel %vm476, 1, 0
        %v605 = vsel %vm477, 1, 0
        %v606 = vsel %vm478, 1, 0
        %v607 = vsel %vm479, 1, 0
        %v608 = vsel %vm480, 1, 0
        %v609 = vsel %vm481, 1, 0
        %v610 = vsel %vm482, 1, 0
        %v611 = vsel %vm483, 1, 0
        %v612 = vsel %vm484, 1, 0
        %v613 = vsel %vm485, 1, 0
        %v614 = vsel %vm486, 1, 0
        %v615 = vsel %vm487, 1, 0
        %v616 = vsel %vm488, 1, 0
        %v617 = vsel %vm489, 1, 0
        %v618 = vsel %vm490, 1, 0
        %v619 = vsel %vm491, 1, 0
        %v620 = vsel %vm492, 1, 0
        %v621 = vsel %vm493, 1, 0
        %v622 = vsel %vm494, 1, 0
        %v623 = vsel %vm495, 1, 0
        %v624 = vsel %vm496, 1, 0
        %v625 = vsel %vm497, 1, 0
        %v626 = vsel %vm498, 1, 0
        %v627 = vsel %vm499, 1, 0
        %v628 = vsel %vm500, 1, 0
        %v629 = vsel %vm501, 1, 0
        %v630 = vsel %vm502, 1, 0
        %v631 = vsel %vm503, 1, 0
        %v632 = vsel %vm504, 1, 0
        %v633 = vsel %vm505, 1, 0
        %v634 = vsel %vm506, 1, 0
        %v635 = vsel %vm507, 1, 0
        %v636 = vsel %vm508, 1, 0
        %v637 = vsel %vm509, 1, 0
        %v638 = vsel %vm510, 1, 0
        %v639 = vsel %vm511, 1, 0
        %v640 = vsel %vm512, 1, 0
        %v641 = vsel %vm513, 1, 0
        %v642 = vsel %vm514, 1, 0
        %v643 = vsel %vm515, 1, 0
        %v644 = vsel %vm516, 1, 0
        %v645 = vsel %vm517, 1, 0
        %v646 = vsel %vm518, 1, 0
        %v647 = vsel %vm519, 1, 0
        %v648 = vsel %vm520, 1, 0
        %v649 = vsel %vm521, 1, 0
        %v650 = vsel %vm522, 1, 0
        %v651 = vsel %vm523, 1, 0
        %v652 = vsel %vm524, 1, 0
        %v653 = vsel %vm525, 1, 0
        %v654 = vsel %vm526, 1, 0
        %v655 = vsel %vm527, 1, 0
        %v656 = vsel %vm528, 1, 0
        %v657 = vsel %vm529, 1, 0
        %v658 = vsel %vm530, 1, 0
        %v659 = vsel %vm531, 1, 0
        %v660 = vsel %vm532, 1, 0
        %v661 = vsel %vm533, 1, 0
        %v662 = vsel %vm534, 1, 0
        %v663 = vsel %vm535, 1, 0
        %v664 = vsel %vm536, 1, 0
        %v665 = vsel %vm537, 1, 0
        %v666 = vsel %vm538, 1, 0
        %v667 = vsel %vm539, 1, 0
        %v668 = vsel %vm540, 1, 0
        %v669 = vsel %vm541, 1, 0
        %v670 = vsel %vm542, 1, 0
        %v671 = vsel %vm543, 1, 0
        %v672 = vsel %vm544, 1, 0
        %v673 = vsel %vm545, 1, 0
        %v674 = vsel %vm546, 1, 0
        %v675 = vsel %vm547, 1, 0
        %v676 = vsel %vm548, 1, 0
        %v677 = vsel %vm549, 1, 0
        %v678 = vsel %vm550, 1, 0
        %v679 = vsel %vm551, 1, 0
        %v680 = vsel %vm552, 1, 0
        %v681 = vsel %vm553, 1, 0
        %v682 = vsel %vm554, 1, 0
        %v683 = vsel %vm555, 1, 0
        %v684 = vsel %vm556, 1, 0
        %v685 = vsel %vm557, 1, 0
        %v686 = vsel %vm558, 1, 0
        %v687 = vsel %vm559, 1, 0
        %v688 = vsel %vm560, 1, 0
        %v689 = vsel %vm561, 1, 0
        %v690 = vsel %vm562, 1, 0
        %v691 = vsel %vm563, 1, 0
        %v692 = vsel %vm564, 1, 0
        %v693 = vsel %vm565, 1, 0
        %v694 = vsel %vm566, 1, 0
        %v695 = vsel %vm567, 1, 0
        %v696 = vsel %vm568, 1, 0
        %v697 = vsel %vm569, 1, 0
        %v698 = vsel %vm570, 1, 0
        %v699 = vsel %vm571, 1, 0
        %v700 = vsel %vm572, 1, 0
        %v701 = vsel %vm573, 1, 0
        %v702 = vsel %vm574, 1, 0
        %v703 = vsel %vm575, 1, 0
        %v704 = vsel %vm576, 1, 0
        %v705 = vsel %vm577, 1, 0
        %v706 = vsel %vm578, 1, 0
        %v707 = vsel %vm579, 1, 0
        %v708 = vsel %vm580, 1, 0
        %v709 = vsel %vm581, 1, 0
        %v710 = vsel %vm582, 1, 0
        %v711 = vsel %vm583, 1, 0
        %v712 = vsel %vm584, 1, 0
        %v713 = vsel %vm585, 1, 0
        %v714 = vsel %vm586, 1, 0
        %v715 = vcvt.s32.f32 %v587
        %v716 = vcvt.s32.f32 %v588
        %v717 = vcvt.s32.f32 %v589
        %v718 = vcvt.s32.f32 %v590
        %v719 = vcvt.s32.f32 %v591
        %v720 = vcvt.s32.f32 %v592
        %v721 = vcvt.s32.f32 %v593
        %v722 = vcvt.s32.f32 %v594
        %v723 = vcvt.s32.f32 %v595
        %v724 = vcvt.s32.f32 %v596
        %v725 = vcvt.s32.f32 %v597
        %v726 = vcvt.s32.f32 %v598
        %v727 = vcvt.s32.f32 %v599
        %v728 = vcvt.s32.f32 %v600
        %v729 = vcvt.s32.f32 %v601
        %v730 = vcvt.s32.f32 %v602
        %v731 = vcvt.s32.f32 %v603
        %v732 = vcvt.s32.f32 %v604
        %v733 = vcvt.s32.f32 %v605
        %v734 = vcvt.s32.f32 %v606
        %v735 = vcvt.s32.f32 %v607
        %v736 = vcvt.s32.f32 %v608
        %v737 = vcvt.s32.f32 %v609
        %v738 = vcvt.s32.f32 %v610
        %v739 = vcvt.s32.f32 %v611
        %v740 = vcvt.s32.f32 %v612
        %v741 = vcvt.s32.f32 %v613
        %v742 = vcvt.s32.f32 %v614
        %v743 = vcvt.s32.f32 %v615
        %v744 = vcvt.s32.f32 %v616
        %v745 = vcvt.s32.f32 %v617
        %v746 = vcvt.s32.f32 %v618
        %v747 = vcvt.s32.f32 %v619
        %v748 = vcvt.s32.f32 %v620
        %v749 = vcvt.s32.f32 %v621
        %v750 = vcvt.s32.f32 %v622
        %v751 = vcvt.s32.f32 %v623
        %v752 = vcvt.s32.f32 %v624
        %v753 = vcvt.s32.f32 %v625
        %v754 = vcvt.s32.f32 %v626
        %v755 = vcvt.s32.f32 %v627
        %v756 = vcvt.s32.f32 %v628
        %v757 = vcvt.s32.f32 %v629
        %v758 = vcvt.s32.f32 %v630
        %v759 = vcvt.s32.f32 %v631
        %v760 = vcvt.s32.f32 %v632
        %v761 = vcvt.s32.f32 %v633
        %v762 = vcvt.s32.f32 %v634
        %v763 = vcvt.s32.f32 %v635
        %v764 = vcvt.s32.f32 %v636
        %v765 = vcvt.s32.f32 %v637
        %v766 = vcvt.s32.f32 %v638
        %v767 = vcvt.s32.f32 %v639
        %v768 = vcvt.s32.f32 %v640
        %v769 = vcvt.s32.f32 %v641
        %v770 = vcvt.s32.f32 %v642
        %v771 = vcvt.s32.f32 %v643
        %v772 = vcvt.s32.f32 %v644
        %v773 = vcvt.s32.f32 %v645
        %v774 = vcvt.s32.f32 %v646
        %v775 = vcvt.s32.f32 %v647
        %v776 = vcvt.s32.f32 %v648
        %v777 = vcvt.s32.f32 %v649
        %v778 = vcvt.s32.f32 %v650
        %v779 = vcvt.s32.f32 %v651
        %v780 = vcvt.s32.f32 %v652
        %v781 = vcvt.s32.f32 %v653
        %v782 = vcvt.s32.f32 %v654
        %v783 = vcvt.s32.f32 %v655
        %v784 = vcvt.s32.f32 %v656
        %v785 = vcvt.s32.f32 %v657
        %v786 = vcvt.s32.f32 %v658
        %v787 = vcvt.s32.f32 %v659
        %v788 = vcvt.s32.f32 %v660
        %v789 = vcvt.s32.f32 %v661
        %v790 = vcvt.s32.f32 %v662
        %v791 = vcvt.s32.f32 %v663
        %v792 = vcvt.s32.f32 %v664
        %v793 = vcvt.s32.f32 %v665
        %v794 = vcvt.s32.f32 %v666
        %v795 = vcvt.s32.f32 %v667
        %v796 = vcvt.s32.f32 %v668
        %v797 = vcvt.s32.f32 %v669
        %v798 = vcvt.s32.f32 %v670
        %v799 = vcvt.s32.f32 %v671
        %v800 = vcvt.s32.f32 %v672
        %v801 = vcvt.s32.f32 %v673
        %v802 = vcvt.s32.f32 %v674
        %v803 = vcvt.s32.f32 %v675
        %v804 = vcvt.s32.f32 %v676
        %v805 = vcvt.s32.f32 %v677
        %v806 = vcvt.s32.f32 %v678
        %v807 = vcvt.s32.f32 %v679
        %v808 = vcvt.s32.f32 %v680
        %v809 = vcvt.s32.f32 %v681
        %v810 = vcvt.s32.f32 %v682
        %v811 = vcvt.s32.f32 %v683
        %v812 = vcvt.s32.f32 %v684
        %v813 = vcvt.s32.f32 %v685
        %v814 = vcvt.s32.f32 %v686
        %v815 = vcvt.s32.f32 %v687
        %v816 = vcvt.s32.f32 %v688
        %v817 = vcvt.s32.f32 %v689
        %v818 = vcvt.s32.f32 %v690
        %v819 = vcvt.s32.f32 %v691
        %v820 = vcvt.s32.f32 %v692
        %v821 = vcvt.s32.f32 %v693
        %v822 = vcvt.s32.f32 %v694
        %v823 = vcvt.s32.f32 %v695
        %v824 = vcvt.s32.f32 %v696
        %v825 = vcvt.s32.f32 %v697
        %v826 = vcvt.s32.f32 %v698
        %v827 = vcvt.s32.f32 %v699
        %v828 = vcvt.s32.f32 %v700
        %v829 = vcvt.s32.f32 %v701
        %v830 = vcvt.s32.f32 %v702
        %v831 = vcvt.s32.f32 %v703
        %v832 = vcvt.s32.f32 %v704
        %v833 = vcvt.s32.f32 %v705
        %v834 = vcvt.s32.f32 %v706
        %v835 = vcvt.s32.f32 %v707
        %v836 = vcvt.s32.f32 %v708
        %v837 = vcvt.s32.f32 %v709
        %v838 = vcvt.s32.f32 %v710
        %v839 = vcvt.s32.f32 %v711
        %v840 = vcvt.s32.f32 %v712
        %v841 = vcvt.s32.f32 %v713
        %v842 = vcvt.s32.f32 %v714
        %v843 = vld [vmem:[%s194] sm:$0xff]
        %v844 = vld [vmem:[%s194 + $0x8] sm:$0xff]
        %v845 = vld [vmem:[%s194 + $0x10] sm:$0xff]
        %v846 = vld [vmem:[%s194 + $0x18] sm:$0xff]
        %v847 = vld [vmem:[%s194 + $0x20] sm:$0xff]
        %v848 = vld [vmem:[%s194 + $0x28] sm:$0xff]
        %v849 = vld [vmem:[%s194 + $0x30] sm:$0xff]
        %v850 = vld [vmem:[%s194 + $0x38] sm:$0xff]
        %v851 = vld [vmem:[%s194 + $0x40] sm:$0xff]
        %v852 = vld [vmem:[%s194 + $0x48] sm:$0xff]
        %v853 = vld [vmem:[%s194 + $0x50] sm:$0xff]
        %v854 = vld [vmem:[%s194 + $0x58] sm:$0xff]
        %v855 = vld [vmem:[%s194 + $0x60] sm:$0xff]
        %v856 = vld [vmem:[%s194 + $0x68] sm:$0xff]
        %v857 = vld [vmem:[%s194 + $0x70] sm:$0xff]
        %v858 = vld [vmem:[%s194 + $0x78] sm:$0xff]
        %v859 = vld [vmem:[%s194 + $0x80] sm:$0xff]
        %v860 = vld [vmem:[%s194 + $0x88] sm:$0xff]
        %v861 = vld [vmem:[%s194 + $0x90] sm:$0xff]
        %v862 = vld [vmem:[%s194 + $0x98] sm:$0xff]
        %v863 = vld [vmem:[%s194 + $0xa0] sm:$0xff]
        %v864 = vld [vmem:[%s194 + $0xa8] sm:$0xff]
        %v865 = vld [vmem:[%s194 + $0xb0] sm:$0xff]
        %v866 = vld [vmem:[%s194 + $0xb8] sm:$0xff]
        %v867 = vld [vmem:[%s194 + $0xc0] sm:$0xff]
        %v868 = vld [vmem:[%s194 + $0xc8] sm:$0xff]
        %v869 = vld [vmem:[%s194 + $0xd0] sm:$0xff]
        %v870 = vld [vmem:[%s194 + $0xd8] sm:$0xff]
        %v871 = vld [vmem:[%s194 + $0xe0] sm:$0xff]
        %v872 = vld [vmem:[%s194 + $0xe8] sm:$0xff]
        %v873 = vld [vmem:[%s194 + $0xf0] sm:$0xff]
        %v874 = vld [vmem:[%s194 + $0xf8] sm:$0xff]
        %875 = vmatpush.msra.mxu0 %v858
        %876 = vmatpush.msra.mxu0 %v857
        %877 = vmatpush.msra.mxu0 %v856
        %878 = vmatpush.msra.mxu0 %v855
        %879 = vmatpush.msra.mxu0 %v854
        %880 = vmatpush.msra.mxu0 %v853
        %881 = vmatpush.msra.mxu0 %v852
        %882 = vmatpush.msra.mxu0 %v851
        %883 = vmatpush.msra.mxu0 %v850
        %884 = vmatpush.msra.mxu0 %v849
        %885 = vmatpush.msra.mxu0 %v848
        %886 = vmatpush.msra.mxu0 %v847
        %887 = vmatpush.msra.mxu0 %v846
        %888 = vmatpush.msra.mxu0 %v845
        %889 = vmatpush.msra.mxu0 %v844
        %890 = vmatpush.msra.mxu0 %v843
        %891 = vmatmul.f32.gmra.mxu0 %v715
        %v892 = vpop.f32.mrf.mxu0
        %v893 = vadd.f32 0.0, %v892
        %894 = vmatmul.f32.gmra.mxu0 %v717
        %v895 = vpop.f32.mrf.mxu0
        %v896 = vadd.f32 0.0, %v895
        %897 = vmatmul.f32.gmra.mxu0 %v719
        %v898 = vpop.f32.mrf.mxu0
        %v899 = vadd.f32 0.0, %v898
        %900 = vmatmul.f32.gmra.mxu0 %v721
        %v901 = vpop.f32.mrf.mxu0
        %v902 = vadd.f32 0.0, %v901
        %903 = vmatmul.f32.gmra.mxu0 %v723
        %v904 = vpop.f32.mrf.mxu0
        %v905 = vadd.f32 0.0, %v904
        %906 = vmatmul.f32.gmra.mxu0 %v725
        %v907 = vpop.f32.mrf.mxu0
        %v908 = vadd.f32 0.0, %v907
        %909 = vmatmul.f32.gmra.mxu0 %v727
        %v910 = vpop.f32.mrf.mxu0
        %v911 = vadd.f32 0.0, %v910
        %912 = vmatmul.f32.gmra.mxu0 %v729
        %v913 = vpop.f32.mrf.mxu0
        %v914 = vadd.f32 0.0, %v913
        %915 = vmatmul.f32.gmra.mxu0 %v731
        %v916 = vpop.f32.mrf.mxu0
        %v917 = vadd.f32 0.0, %v916
        %918 = vmatmul.f32.gmra.mxu0 %v733
        %v919 = vpop.f32.mrf.mxu0
        %v920 = vadd.f32 0.0, %v919
        %921 = vmatmul.f32.gmra.mxu0 %v735
        %v922 = vpop.f32.mrf.mxu0
        %v923 = vadd.f32 0.0, %v922
        %924 = vmatmul.f32.gmra.mxu0 %v737
        %v925 = vpop.f32.mrf.mxu0
        %v926 = vadd.f32 0.0, %v925
        %927 = vmatmul.f32.gmra.mxu0 %v739
        %v928 = vpop.f32.mrf.mxu0
        %v929 = vadd.f32 0.0, %v928
        %930 = vmatmul.f32.gmra.mxu0 %v741
        %v931 = vpop.f32.mrf.mxu0
        %v932 = vadd.f32 0.0, %v931
        %933 = vmatmul.f32.gmra.mxu0 %v743
        %v934 = vpop.f32.mrf.mxu0
        %v935 = vadd.f32 0.0, %v934
        %936 = vmatmul.f32.gmra.mxu0 %v745
        %v937 = vpop.f32.mrf.mxu0
        %v938 = vadd.f32 0.0, %v937
        %939 = vmatmul.f32.gmra.mxu0 %v747
        %v940 = vpop.f32.mrf.mxu0
        %v941 = vadd.f32 0.0, %v940
        %942 = vmatmul.f32.gmra.mxu0 %v749
        %v943 = vpop.f32.mrf.mxu0
        %v944 = vadd.f32 0.0, %v943
        %945 = vmatmul.f32.gmra.mxu0 %v751
        %v946 = vpop.f32.mrf.mxu0
        %v947 = vadd.f32 0.0, %v946
        %948 = vmatmul.f32.gmra.mxu0 %v753
        %v949 = vpop.f32.mrf.mxu0
        %v950 = vadd.f32 0.0, %v949
        %951 = vmatmul.f32.gmra.mxu0 %v755
        %v952 = vpop.f32.mrf.mxu0
        %v953 = vadd.f32 0.0, %v952
        %954 = vmatmul.f32.gmra.mxu0 %v757
        %v955 = vpop.f32.mrf.mxu0
        %v956 = vadd.f32 0.0, %v955
        %957 = vmatmul.f32.gmra.mxu0 %v759
        %v958 = vpop.f32.mrf.mxu0
        %v959 = vadd.f32 0.0, %v958
        %960 = vmatmul.f32.gmra.mxu0 %v761
        %v961 = vpop.f32.mrf.mxu0
        %v962 = vadd.f32 0.0, %v961
        %963 = vmatmul.f32.gmra.mxu0 %v763
        %v964 = vpop.f32.mrf.mxu0
        %v965 = vadd.f32 0.0, %v964
        %966 = vmatmul.f32.gmra.mxu0 %v765
        %v967 = vpop.f32.mrf.mxu0
        %v968 = vadd.f32 0.0, %v967
        %969 = vmatmul.f32.gmra.mxu0 %v767
        %v970 = vpop.f32.mrf.mxu0
        %v971 = vadd.f32 0.0, %v970
        %972 = vmatmul.f32.gmra.mxu0 %v769
        %v973 = vpop.f32.mrf.mxu0
        %v974 = vadd.f32 0.0, %v973
        %975 = vmatmul.f32.gmra.mxu0 %v771
        %v976 = vpop.f32.mrf.mxu0
        %v977 = vadd.f32 0.0, %v976
        %978 = vmatmul.f32.gmra.mxu0 %v773
        %v979 = vpop.f32.mrf.mxu0
        %v980 = vadd.f32 0.0, %v979
        %981 = vmatmul.f32.gmra.mxu0 %v775
        %v982 = vpop.f32.mrf.mxu0
        %v983 = vadd.f32 0.0, %v982
        %984 = vmatmul.f32.gmra.mxu0 %v777
        %v985 = vpop.f32.mrf.mxu0
        %v986 = vadd.f32 0.0, %v985
        %987 = vmatmul.f32.gmra.mxu0 %v779
        %v988 = vpop.f32.mrf.mxu0
        %v989 = vadd.f32 0.0, %v988
        %990 = vmatmul.f32.gmra.mxu0 %v781
        %v991 = vpop.f32.mrf.mxu0
        %v992 = vadd.f32 0.0, %v991
        %993 = vmatmul.f32.gmra.mxu0 %v783
        %v994 = vpop.f32.mrf.mxu0
        %v995 = vadd.f32 0.0, %v994
        %996 = vmatmul.f32.gmra.mxu0 %v785
        %v997 = vpop.f32.mrf.mxu0
        %v998 = vadd.f32 0.0, %v997
        %999 = vmatmul.f32.gmra.mxu0 %v787
        %v1000 = vpop.f32.mrf.mxu0
        %v1001 = vadd.f32 0.0, %v1000
        %1002 = vmatmul.f32.gmra.mxu0 %v789
        %v1003 = vpop.f32.mrf.mxu0
        %v1004 = vadd.f32 0.0, %v1003
        %1005 = vmatmul.f32.gmra.mxu0 %v791
        %v1006 = vpop.f32.mrf.mxu0
        %v1007 = vadd.f32 0.0, %v1006
        %1008 = vmatmul.f32.gmra.mxu0 %v793
        %v1009 = vpop.f32.mrf.mxu0
        %v1010 = vadd.f32 0.0, %v1009
        %1011 = vmatmul.f32.gmra.mxu0 %v795
        %v1012 = vpop.f32.mrf.mxu0
        %v1013 = vadd.f32 0.0, %v1012
        %1014 = vmatmul.f32.gmra.mxu0 %v797
        %v1015 = vpop.f32.mrf.mxu0
        %v1016 = vadd.f32 0.0, %v1015
        %1017 = vmatmul.f32.gmra.mxu0 %v799
        %v1018 = vpop.f32.mrf.mxu0
        %v1019 = vadd.f32 0.0, %v1018
        %1020 = vmatmul.f32.gmra.mxu0 %v801
        %v1021 = vpop.f32.mrf.mxu0
        %v1022 = vadd.f32 0.0, %v1021
        %1023 = vmatmul.f32.gmra.mxu0 %v803
        %v1024 = vpop.f32.mrf.mxu0
        %v1025 = vadd.f32 0.0, %v1024
        %1026 = vmatmul.f32.gmra.mxu0 %v805
        %v1027 = vpop.f32.mrf.mxu0
        %v1028 = vadd.f32 0.0, %v1027
        %1029 = vmatmul.f32.gmra.mxu0 %v807
        %v1030 = vpop.f32.mrf.mxu0
        %v1031 = vadd.f32 0.0, %v1030
        %1032 = vmatmul.f32.gmra.mxu0 %v809
        %v1033 = vpop.f32.mrf.mxu0
        %v1034 = vadd.f32 0.0, %v1033
        %1035 = vmatmul.f32.gmra.mxu0 %v811
        %v1036 = vpop.f32.mrf.mxu0
        %v1037 = vadd.f32 0.0, %v1036
        %1038 = vmatmul.f32.gmra.mxu0 %v813
        %v1039 = vpop.f32.mrf.mxu0
        %v1040 = vadd.f32 0.0, %v1039
        %1041 = vmatmul.f32.gmra.mxu0 %v815
        %v1042 = vpop.f32.mrf.mxu0
        %v1043 = vadd.f32 0.0, %v1042
        %1044 = vmatmul.f32.gmra.mxu0 %v817
        %v1045 = vpop.f32.mrf.mxu0
        %v1046 = vadd.f32 0.0, %v1045
        %1047 = vmatmul.f32.gmra.mxu0 %v819
        %v1048 = vpop.f32.mrf.mxu0
        %v1049 = vadd.f32 0.0, %v1048
        %1050 = vmatmul.f32.gmra.mxu0 %v821
        %v1051 = vpop.f32.mrf.mxu0
        %v1052 = vadd.f32 0.0, %v1051
        %1053 = vmatmul.f32.gmra.mxu0 %v823
        %v1054 = vpop.f32.mrf.mxu0
        %v1055 = vadd.f32 0.0, %v1054
        %1056 = vmatmul.f32.gmra.mxu0 %v825
        %v1057 = vpop.f32.mrf.mxu0
        %v1058 = vadd.f32 0.0, %v1057
        %1059 = vmatmul.f32.gmra.mxu0 %v827
        %v1060 = vpop.f32.mrf.mxu0
        %v1061 = vadd.f32 0.0, %v1060
        %1062 = vmatmul.f32.gmra.mxu0 %v829
        %v1063 = vpop.f32.mrf.mxu0
        %v1064 = vadd.f32 0.0, %v1063
        %1065 = vmatmul.f32.gmra.mxu0 %v831
        %v1066 = vpop.f32.mrf.mxu0
        %v1067 = vadd.f32 0.0, %v1066
        %1068 = vmatmul.f32.gmra.mxu0 %v833
        %v1069 = vpop.f32.mrf.mxu0
        %v1070 = vadd.f32 0.0, %v1069
        %1071 = vmatmul.f32.gmra.mxu0 %v835
        %v1072 = vpop.f32.mrf.mxu0
        %v1073 = vadd.f32 0.0, %v1072
        %1074 = vmatmul.f32.gmra.mxu0 %v837
        %v1075 = vpop.f32.mrf.mxu0
        %v1076 = vadd.f32 0.0, %v1075
        %1077 = vmatmul.f32.gmra.mxu0 %v839
        %v1078 = vpop.f32.mrf.mxu0
        %v1079 = vadd.f32 0.0, %v1078
        %1080 = vmatmul.f32.gmra.mxu0 %v841
        %v1081 = vpop.f32.mrf.mxu0
        %v1082 = vadd.f32 0.0, %v1081
        %1083 = vdwg.mxu0
        %1084 = vmatpush.msra.mxu0 %v874
        %1085 = vmatpush.msra.mxu0 %v873
        %1086 = vmatpush.msra.mxu0 %v872
        %1087 = vmatpush.msra.mxu0 %v871
        %1088 = vmatpush.msra.mxu0 %v870
        %1089 = vmatpush.msra.mxu0 %v869
        %1090 = vmatpush.msra.mxu0 %v868
        %1091 = vmatpush.msra.mxu0 %v867
        %1092 = vmatpush.msra.mxu0 %v866
        %1093 = vmatpush.msra.mxu0 %v865
        %1094 = vmatpush.msra.mxu0 %v864
        %1095 = vmatpush.msra.mxu0 %v863
        %1096 = vmatpush.msra.mxu0 %v862
        %1097 = vmatpush.msra.mxu0 %v861
        %1098 = vmatpush.msra.mxu0 %v860
        %1099 = vmatpush.msra.mxu0 %v859
        %1100 = vmatmul.f32.gmra.mxu0 %v716
        %v1101 = vpop.f32.mrf.mxu0
        %v1102 = vadd.f32 %v893, %v1101
        %1103 = vmatmul.f32.gmra.mxu0 %v718
        %v1104 = vpop.f32.mrf.mxu0
        %v1105 = vadd.f32 %v896, %v1104
        %1106 = vmatmul.f32.gmra.mxu0 %v720
        %v1107 = vpop.f32.mrf.mxu0
        %v1108 = vadd.f32 %v899, %v1107
        %1109 = vmatmul.f32.gmra.mxu0 %v722
        %v1110 = vpop.f32.mrf.mxu0
        %v1111 = vadd.f32 %v902, %v1110
        %1112 = vmatmul.f32.gmra.mxu0 %v724
        %v1113 = vpop.f32.mrf.mxu0
        %v1114 = vadd.f32 %v905, %v1113
        %1115 = vmatmul.f32.gmra.mxu0 %v726
        %v1116 = vpop.f32.mrf.mxu0
        %v1117 = vadd.f32 %v908, %v1116
        %1118 = vmatmul.f32.gmra.mxu0 %v728
        %v1119 = vpop.f32.mrf.mxu0
        %v1120 = vadd.f32 %v911, %v1119
        %1121 = vmatmul.f32.gmra.mxu0 %v730
        %v1122 = vpop.f32.mrf.mxu0
        %v1123 = vadd.f32 %v914, %v1122
        %1124 = vmatmul.f32.gmra.mxu0 %v732
        %v1125 = vpop.f32.mrf.mxu0
        %v1126 = vadd.f32 %v917, %v1125
        %1127 = vmatmul.f32.gmra.mxu0 %v734
        %v1128 = vpop.f32.mrf.mxu0
        %v1129 = vadd.f32 %v920, %v1128
        %1130 = vmatmul.f32.gmra.mxu0 %v736
        %v1131 = vpop.f32.mrf.mxu0
        %v1132 = vadd.f32 %v923, %v1131
        %1133 = vmatmul.f32.gmra.mxu0 %v738
        %v1134 = vpop.f32.mrf.mxu0
        %v1135 = vadd.f32 %v926, %v1134
        %1136 = vmatmul.f32.gmra.mxu0 %v740
        %v1137 = vpop.f32.mrf.mxu0
        %v1138 = vadd.f32 %v929, %v1137
        %1139 = vmatmul.f32.gmra.mxu0 %v742
        %v1140 = vpop.f32.mrf.mxu0
        %v1141 = vadd.f32 %v932, %v1140
        %1142 = vmatmul.f32.gmra.mxu0 %v744
        %v1143 = vpop.f32.mrf.mxu0
        %v1144 = vadd.f32 %v935, %v1143
        %1145 = vmatmul.f32.gmra.mxu0 %v746
        %v1146 = vpop.f32.mrf.mxu0
        %v1147 = vadd.f32 %v938, %v1146
        %1148 = vmatmul.f32.gmra.mxu0 %v748
        %v1149 = vpop.f32.mrf.mxu0
        %v1150 = vadd.f32 %v941, %v1149
        %1151 = vmatmul.f32.gmra.mxu0 %v750
        %v1152 = vpop.f32.mrf.mxu0
        %v1153 = vadd.f32 %v944, %v1152
        %1154 = vmatmul.f32.gmra.mxu0 %v752
        %v1155 = vpop.f32.mrf.mxu0
        %v1156 = vadd.f32 %v947, %v1155
        %1157 = vmatmul.f32.gmra.mxu0 %v754
        %v1158 = vpop.f32.mrf.mxu0
        %v1159 = vadd.f32 %v950, %v1158
        %1160 = vmatmul.f32.gmra.mxu0 %v756
        %v1161 = vpop.f32.mrf.mxu0
        %v1162 = vadd.f32 %v953, %v1161
        %1163 = vmatmul.f32.gmra.mxu0 %v758
        %v1164 = vpop.f32.mrf.mxu0
        %v1165 = vadd.f32 %v956, %v1164
        %1166 = vmatmul.f32.gmra.mxu0 %v760
        %v1167 = vpop.f32.mrf.mxu0
        %v1168 = vadd.f32 %v959, %v1167
        %1169 = vmatmul.f32.gmra.mxu0 %v762
        %v1170 = vpop.f32.mrf.mxu0
        %v1171 = vadd.f32 %v962, %v1170
        %1172 = vmatmul.f32.gmra.mxu0 %v764
        %v1173 = vpop.f32.mrf.mxu0
        %v1174 = vadd.f32 %v965, %v1173
        %1175 = vmatmul.f32.gmra.mxu0 %v766
        %v1176 = vpop.f32.mrf.mxu0
        %v1177 = vadd.f32 %v968, %v1176
        %1178 = vmatmul.f32.gmra.mxu0 %v768
        %v1179 = vpop.f32.mrf.mxu0
        %v1180 = vadd.f32 %v971, %v1179
        %1181 = vmatmul.f32.gmra.mxu0 %v770
        %v1182 = vpop.f32.mrf.mxu0
        %v1183 = vadd.f32 %v974, %v1182
        %1184 = vmatmul.f32.gmra.mxu0 %v772
        %v1185 = vpop.f32.mrf.mxu0
        %v1186 = vadd.f32 %v977, %v1185
        %1187 = vmatmul.f32.gmra.mxu0 %v774
        %v1188 = vpop.f32.mrf.mxu0
        %v1189 = vadd.f32 %v980, %v1188
        %1190 = vmatmul.f32.gmra.mxu0 %v776
        %v1191 = vpop.f32.mrf.mxu0
        %v1192 = vadd.f32 %v983, %v1191
        %1193 = vmatmul.f32.gmra.mxu0 %v778
        %v1194 = vpop.f32.mrf.mxu0
        %v1195 = vadd.f32 %v986, %v1194
        %1196 = vmatmul.f32.gmra.mxu0 %v780
        %v1197 = vpop.f32.mrf.mxu0
        %v1198 = vadd.f32 %v989, %v1197
        %1199 = vmatmul.f32.gmra.mxu0 %v782
        %v1200 = vpop.f32.mrf.mxu0
        %v1201 = vadd.f32 %v992, %v1200
        %1202 = vmatmul.f32.gmra.mxu0 %v784
        %v1203 = vpop.f32.mrf.mxu0
        %v1204 = vadd.f32 %v995, %v1203
        %1205 = vmatmul.f32.gmra.mxu0 %v786
        %v1206 = vpop.f32.mrf.mxu0
        %v1207 = vadd.f32 %v998, %v1206
        %1208 = vmatmul.f32.gmra.mxu0 %v788
        %v1209 = vpop.f32.mrf.mxu0
        %v1210 = vadd.f32 %v1001, %v1209
        %1211 = vmatmul.f32.gmra.mxu0 %v790
        %v1212 = vpop.f32.mrf.mxu0
        %v1213 = vadd.f32 %v1004, %v1212
        %1214 = vmatmul.f32.gmra.mxu0 %v792
        %v1215 = vpop.f32.mrf.mxu0
        %v1216 = vadd.f32 %v1007, %v1215
        %1217 = vmatmul.f32.gmra.mxu0 %v794
        %v1218 = vpop.f32.mrf.mxu0
        %v1219 = vadd.f32 %v1010, %v1218
        %1220 = vmatmul.f32.gmra.mxu0 %v796
        %v1221 = vpop.f32.mrf.mxu0
        %v1222 = vadd.f32 %v1013, %v1221
        %1223 = vmatmul.f32.gmra.mxu0 %v798
        %v1224 = vpop.f32.mrf.mxu0
        %v1225 = vadd.f32 %v1016, %v1224
        %1226 = vmatmul.f32.gmra.mxu0 %v800
        %v1227 = vpop.f32.mrf.mxu0
        %v1228 = vadd.f32 %v1019, %v1227
        %1229 = vmatmul.f32.gmra.mxu0 %v802
        %v1230 = vpop.f32.mrf.mxu0
        %v1231 = vadd.f32 %v1022, %v1230
        %1232 = vmatmul.f32.gmra.mxu0 %v804
        %v1233 = vpop.f32.mrf.mxu0
        %v1234 = vadd.f32 %v1025, %v1233
        %1235 = vmatmul.f32.gmra.mxu0 %v806
        %v1236 = vpop.f32.mrf.mxu0
        %v1237 = vadd.f32 %v1028, %v1236
        %1238 = vmatmul.f32.gmra.mxu0 %v808
        %v1239 = vpop.f32.mrf.mxu0
        %v1240 = vadd.f32 %v1031, %v1239
        %1241 = vmatmul.f32.gmra.mxu0 %v810
        %v1242 = vpop.f32.mrf.mxu0
        %v1243 = vadd.f32 %v1034, %v1242
        %1244 = vmatmul.f32.gmra.mxu0 %v812
        %v1245 = vpop.f32.mrf.mxu0
        %v1246 = vadd.f32 %v1037, %v1245
        %1247 = vmatmul.f32.gmra.mxu0 %v814
        %v1248 = vpop.f32.mrf.mxu0
        %v1249 = vadd.f32 %v1040, %v1248
        %1250 = vmatmul.f32.gmra.mxu0 %v816
        %v1251 = vpop.f32.mrf.mxu0
        %v1252 = vadd.f32 %v1043, %v1251
        %1253 = vmatmul.f32.gmra.mxu0 %v818
        %v1254 = vpop.f32.mrf.mxu0
        %v1255 = vadd.f32 %v1046, %v1254
        %1256 = vmatmul.f32.gmra.mxu0 %v820
        %v1257 = vpop.f32.mrf.mxu0
        %v1258 = vadd.f32 %v1049, %v1257
        %1259 = vmatmul.f32.gmra.mxu0 %v822
        %v1260 = vpop.f32.mrf.mxu0
        %v1261 = vadd.f32 %v1052, %v1260
        %1262 = vmatmul.f32.gmra.mxu0 %v824
        %v1263 = vpop.f32.mrf.mxu0
        %v1264 = vadd.f32 %v1055, %v1263
        %1265 = vmatmul.f32.gmra.mxu0 %v826
        %v1266 = vpop.f32.mrf.mxu0
        %v1267 = vadd.f32 %v1058, %v1266
        %1268 = vmatmul.f32.gmra.mxu0 %v828
        %v1269 = vpop.f32.mrf.mxu0
        %v1270 = vadd.f32 %v1061, %v1269
        %1271 = vmatmul.f32.gmra.mxu0 %v830
        %v1272 = vpop.f32.mrf.mxu0
        %v1273 = vadd.f32 %v1064, %v1272
        %1274 = vmatmul.f32.gmra.mxu0 %v832
        %v1275 = vpop.f32.mrf.mxu0
        %v1276 = vadd.f32 %v1067, %v1275
        %1277 = vmatmul.f32.gmra.mxu0 %v834
        %v1278 = vpop.f32.mrf.mxu0
        %v1279 = vadd.f32 %v1070, %v1278
        %1280 = vmatmul.f32.gmra.mxu0 %v836
        %v1281 = vpop.f32.mrf.mxu0
        %v1282 = vadd.f32 %v1073, %v1281
        %1283 = vmatmul.f32.gmra.mxu0 %v838
        %v1284 = vpop.f32.mrf.mxu0
        %v1285 = vadd.f32 %v1076, %v1284
        %1286 = vmatmul.f32.gmra.mxu0 %v840
        %v1287 = vpop.f32.mrf.mxu0
        %v1288 = vadd.f32 %v1079, %v1287
        %1289 = vmatmul.f32.gmra.mxu0 %v842
        %v1290 = vpop.f32.mrf.mxu0
        %v1291 = vadd.f32 %v1082, %v1290
        %1292 = vdwg.mxu0
        %1293 = vst [vmem:[%s176] sm:$0xff] %v1102
        %1294 = vst [vmem:[%s176 + $0x8] sm:$0xff] %v1105
        %1295 = vst [vmem:[%s176 + $0x10] sm:$0xff] %v1108
        %1296 = vst [vmem:[%s176 + $0x18] sm:$0xff] %v1111
        %1297 = vst [vmem:[%s176 + $0x20] sm:$0xff] %v1114
        %1298 = vst [vmem:[%s176 + $0x28] sm:$0xff] %v1117
        %1299 = vst [vmem:[%s176 + $0x30] sm:$0xff] %v1120
        %1300 = vst [vmem:[%s176 + $0x38] sm:$0xff] %v1123
        %1301 = vst [vmem:[%s176 + $0x40] sm:$0xff] %v1126
        %1302 = vst [vmem:[%s176 + $0x48] sm:$0xff] %v1129
        %1303 = vst [vmem:[%s176 + $0x50] sm:$0xff] %v1132
        %1304 = vst [vmem:[%s176 + $0x58] sm:$0xff] %v1135
        %1305 = vst [vmem:[%s176 + $0x60] sm:$0xff] %v1138
        %1306 = vst [vmem:[%s176 + $0x68] sm:$0xff] %v1141
        %1307 = vst [vmem:[%s176 + $0x70] sm:$0xff] %v1144
        %1308 = vst [vmem:[%s176 + $0x78] sm:$0xff] %v1147
        %1309 = vst [vmem:[%s176 + $0x80] sm:$0xff] %v1150
        %1310 = vst [vmem:[%s176 + $0x88] sm:$0xff] %v1153
        %1311 = vst [vmem:[%s176 + $0x90] sm:$0xff] %v1156
        %1312 = vst [vmem:[%s176 + $0x98] sm:$0xff] %v1159
        %1313 = vst [vmem:[%s176 + $0xa0] sm:$0xff] %v1162
        %1314 = vst [vmem:[%s176 + $0xa8] sm:$0xff] %v1165
        %1315 = vst [vmem:[%s176 + $0xb0] sm:$0xff] %v1168
        %1316 = vst [vmem:[%s176 + $0xb8] sm:$0xff] %v1171
        %1317 = vst [vmem:[%s176 + $0xc0] sm:$0xff] %v1174
        %1318 = vst [vmem:[%s176 + $0xc8] sm:$0xff] %v1177
        %1319 = vst [vmem:[%s176 + $0xd0] sm:$0xff] %v1180
        %1320 = vst [vmem:[%s176 + $0xd8] sm:$0xff] %v1183
        %1321 = vst [vmem:[%s176 + $0xe0] sm:$0xff] %v1186
        %1322 = vst [vmem:[%s176 + $0xe8] sm:$0xff] %v1189
        %1323 = vst [vmem:[%s176 + $0xf0] sm:$0xff] %v1192
        %1324 = vst [vmem:[%s176 + $0xf8] sm:$0xff] %v1195
        %1325 = vst [vmem:[%s176 + $0x100] sm:$0xff] %v1198
        %1326 = vst [vmem:[%s176 + $0x108] sm:$0xff] %v1201
        %1327 = vst [vmem:[%s176 + $0x110] sm:$0xff] %v1204
        %1328 = vst [vmem:[%s176 + $0x118] sm:$0xff] %v1207
        %1329 = vst [vmem:[%s176 + $0x120] sm:$0xff] %v1210
        %1330 = vst [vmem:[%s176 + $0x128] sm:$0xff] %v1213
        %1331 = vst [vmem:[%s176 + $0x130] sm:$0xff] %v1216
        %1332 = vst [vmem:[%s176 + $0x138] sm:$0xff] %v1219
        %1333 = vst [vmem:[%s176 + $0x140] sm:$0xff] %v1222
        %1334 = vst [vmem:[%s176 + $0x148] sm:$0xff] %v1225
        %1335 = vst [vmem:[%s176 + $0x150] sm:$0xff] %v1228
        %1336 = vst [vmem:[%s176 + $0x158] sm:$0xff] %v1231
        %1337 = vst [vmem:[%s176 + $0x160] sm:$0xff] %v1234
        %1338 = vst [vmem:[%s176 + $0x168] sm:$0xff] %v1237
        %1339 = vst [vmem:[%s176 + $0x170] sm:$0xff] %v1240
        %1340 = vst [vmem:[%s176 + $0x178] sm:$0xff] %v1243
        %1341 = vst [vmem:[%s176 + $0x180] sm:$0xff] %v1246
        %1342 = vst [vmem:[%s176 + $0x188] sm:$0xff] %v1249
        %1343 = vst [vmem:[%s176 + $0x190] sm:$0xff] %v1252
        %1344 = vst [vmem:[%s176 + $0x198] sm:$0xff] %v1255
        %1345 = vst [vmem:[%s176 + $0x1a0] sm:$0xff] %v1258
        %1346 = vst [vmem:[%s176 + $0x1a8] sm:$0xff] %v1261
        %1347 = vst [vmem:[%s176 + $0x1b0] sm:$0xff] %v1264
        %1348 = vst [vmem:[%s176 + $0x1b8] sm:$0xff] %v1267
        %1349 = vst [vmem:[%s176 + $0x1c0] sm:$0xff] %v1270
        %1350 = vst [vmem:[%s176 + $0x1c8] sm:$0xff] %v1273
        %1351 = vst [vmem:[%s176 + $0x1d0] sm:$0xff] %v1276
        %1352 = vst [vmem:[%s176 + $0x1d8] sm:$0xff] %v1279
        %1353 = vst [vmem:[%s176 + $0x1e0] sm:$0xff] %v1282
        %1354 = vst [vmem:[%s176 + $0x1e8] sm:$0xff] %v1285
        %1355 = vst [vmem:[%s176 + $0x1f0] sm:$0xff] %v1288
        %1356 = vst [vmem:[%s176 + $0x1f8] sm:$0xff] %v1291
        %s1357 = sand.u32 %s90, 1
        %s1358 = scalar_lea.sflag [#allocation3], %s1357
        %s1359 = sand.u32 %s90, 1
        %s1360 = smul.addr %s1359, 512
        %s1361 = scalar_lea.vmem [#allocation2], %s1360
        // Predicated region
        $region29: #{tpu_custom_call.1} parent=27 // pred_check
          %p1362 = pneg %p100
        $region30: #{tpu_custom_call.1} parent=27 // pred_check_branch
          %1364 = sbr.rel (%p1362) target = $region32
        $region31: #{tpu_custom_call.1} parent=27 // pred_region
          %s1365 = smul.u32 64, %s21
          %s1366 = ssub.s32 150, %s1365
          %p1367 = scmp.lt.s32.totalorder %s1366, 64
          %s1368 = scalar_select %p1367, %s1366, 64
          %s1369 = smul.u32 8, %s1368
          %s1370 = ssub.s32 512, %s1369
          %s1371 = sshll.u32 %s1370, 4
          %1372 = vsyncadd %s1358, %s1371
          %p1373 = scmp.ne.s32.totalorder 0, %s1369
          %s1374 = sadd.s32 %s20, %s1365
          %s1375 = smul.addr %s1374, 8
          %s1376 = scalar_lea.hbm %s2, %s1375
          %s1377 = smul.u32 8, %s1368
          %s1378 = sshll.u32 %s1361, 4
          %s1379 = int_to_ptr.vmem [resolvable:$true] %s1378
          %s1380 = sshll.u32 %s1376, 4
          %s1381 = int_to_ptr.hbm [resolvable:$true] %s1380
          %s1382 = sshll.u32 %s1377, 4
          %1386 = dma.vmem_to_hbm [thread:$0]  (%p1373), %s1379, %s1382, %s1381, %s1358, 128, 128, 8
        $region32: #{tpu_custom_call.1} parent=27 // pred_fallthru
          _
      $region28: #{tpu_custom_call.1} parent=5 // pred_fallthru
        _
      %p1387 = scmp.le.s32.totalorder 2, %s11
      // Predicated region
      $region33: #{tpu_custom_call.1} parent=5 // pred_check
        %p1388 = pneg %p1387
      $region34: #{tpu_custom_call.1} parent=5 // pred_check_branch
        %1390 = sbr.rel (%p1388) target = $region36
      $region35: #{tpu_custom_call.1} parent=5 // pred_region
        %s1391 = ssub.s32 %s11, 2
        // Predicated region
        $region37: #{tpu_custom_call.1} parent=35 // pred_check
          %p1392 = pneg %p106
        $region38: #{tpu_custom_call.1} parent=35 // pred_check_branch
          %1394 = sbr.rel (%p1392) target = $region40
        $region39: #{tpu_custom_call.1} parent=35 // pred_region
          %s1395 = sand.u32 %s91, 1
          %s1396 = scalar_lea.sflag [#allocation3], %s1395
          %s1397 = sand.u32 %s91, 1
          %s1398 = smul.addr %s1397, 512
          %s1399 = scalar_lea.vmem [#allocation2], %s1398
          %1401 = dma.done %s1396, 8192
        $region40: #{tpu_custom_call.1} parent=35 // pred_fallthru
          _
      $region36: #{tpu_custom_call.1} parent=5 // pred_fallthru
        _
    $region6: #{tpu_custom_call.1} parent=1 // loop_footer
      %s15 = sadd.s32 1, %s11
    $region7: #{tpu_custom_call.1} parent=1 // loop_footer_branch
      %10 = sbr.rel target = $region3
    $region8: #{tpu_custom_call.1} parent=1 // loop_exit
      _
    %1402 = vsyncpa [#allocation3], 1
    %s1403 = scalar_lea.sflag [#allocation3], 1
    %1404 = vsyncpa %s1403, 1

</llo_original>
